<compile_context>
chip_gen: v6e
topology: v6e:2x2x1
jax: 0.10.0
libtpu: 0.0.40
codegen_flags: <defaults>
</compile_context>

<pallas_src>
import functools
import math

import jax
import jax.numpy as jnp
from jax.experimental import pallas as pl
from jax.experimental.pallas import tpu as pltpu

HIDDEN = 143          # hidden_node in the PyTorch module
HIDDEN_PAD = 256      # padded to a multiple of 128 lanes (zeros in the pad)
OUTPUT = 1            # output_node (bias=False)
OUT_LANES = 128       # lane-dense output slab; column 0 holds the real result


def _mlp_kernel(x_ref, w1_ref, b1_ref, w2_ref, o_ref, *, activation):
    # x_ref : (TB, D)          activations (one batch tile)
    # w1_ref: (D, HIDDEN_PAD)  hidden1 weight, (in, out) layout, zero-padded cols
    # b1_ref: (1, HIDDEN_PAD)  hidden1 bias, zero-padded
    # w2_ref: (1, HIDDEN_PAD)  output weight row, zero-padded (bias=False)
    # o_ref : (TB, OUT_LANES)  lane-dense output; every lane carries the scalar y
    x = x_ref[...]

    # hidden1: MXU matmul with f32 accumulate, then bias add (VPU).
    h = jnp.dot(x, w1_ref[...], preferred_element_type=jnp.float32) + b1_ref[...]

    if activation == "ReLU":
        h = jnp.maximum(h, 0.0)                 # VPU
    elif activation == "Sigmoid":
        h = jax.nn.sigmoid(h)                   # EUP
    elif activation == "Tanh":
        h = jnp.tanh(h)                         # EUP
    else:
        raise ValueError(f"unsupported activation: {activation}")

    # TODO(synk): dropout is identity in eval mode; training-mode dropout with
    # pltpu.prng_seed / pltpu.prng_random_bits is intentionally omitted.

    # Output projection has a single column -> skip the MXU (would use 1/256
    # of the array); VPU multiply + XLU lane reduction instead.  Padded hidden
    # columns contribute exactly 0 because the w2 pad entries are 0.
    y = jnp.sum(h * w2_ref[...], axis=-1, keepdims=True)          # (TB, 1)

    # Lane-dense store (unmasked full-width vst); wrapper slices column 0.
    o_ref[...] = jnp.broadcast_to(y, o_ref.shape).astype(o_ref.dtype)


def _cost(bt, d, hp, activation):
    transc = 0 if activation == "ReLU" else bt * hp
    return pl.CostEstimate(
        flops=2 * bt * d * hp + 3 * bt * hp,
        transcendentals=transc,
        bytes_accessed=4 * (bt * d + d * hp + 2 * hp + bt * OUT_LANES),
    )


def mlp_forward(x, w1_pad, b1_pad, w2_pad, *, activation="ReLU", batch_tile=256):
    if activation not in ("ReLU", "Sigmoid", "Tanh"):
        raise ValueError(f"unsupported activation: {activation}")

    B, D = x.shape
    Hp = w1_pad.shape[1]
    assert w1_pad.shape == (D, Hp)
    assert b1_pad.shape == (1, Hp) and w2_pad.shape == (1, Hp)

    kernel = functools.partial(_mlp_kernel, activation=activation)

    if B <= batch_tile:
        # Tiny batch: single invocation, all operands VMEM-resident, no grid.
        out = pl.pallas_call(
            kernel,
            out_shape=jax.ShapeDtypeStruct((B, OUT_LANES), jnp.float32),
            in_specs=[pl.BlockSpec(memory_space=pltpu.MemorySpace.VMEM)] * 4,
            out_specs=pl.BlockSpec(memory_space=pltpu.MemorySpace.VMEM),
            cost_estimate=_cost(B, D, Hp, activation),
        )(x, w1_pad, b1_pad, w2_pad)
        return out[:, :OUTPUT]

    # Large batch: tile only the batch axis ("parallel" -> megacore / both v7x
    # TCs).  Weights use constant index_maps so their tiles never change ->
    # fetched once, VMEM-resident for the whole grid.
    TB = batch_tile
    Bp = pl.cdiv(B, TB) * TB
    if Bp != B:
        x = jnp.pad(x, ((0, Bp - B), (0, 0)))
    out = pl.pallas_call(
        kernel,
        out_shape=jax.ShapeDtypeStruct((Bp, OUT_LANES), jnp.float32),
        grid=(Bp // TB,),
        in_specs=[
            pl.BlockSpec((TB, D), lambda i: (i, 0)),
            pl.BlockSpec((D, Hp), lambda i: (0, 0)),
            pl.BlockSpec((1, Hp), lambda i: (0, 0)),
            pl.BlockSpec((1, Hp), lambda i: (0, 0)),
        ],
        out_specs=pl.BlockSpec((TB, OUT_LANES), lambda i: (i, 0)),
        compiler_params=pltpu.CompilerParams(
            dimension_semantics=("parallel",),
        ),
        cost_estimate=_cost(Bp, D, Hp, activation),
    )(x, w1_pad, b1_pad, w2_pad)
    return out[:B, :OUTPUT]


def init_params(key, input_layer):
    # Mimic nn.Linear default init: U(-1/sqrt(fan_in), 1/sqrt(fan_in)).
    k1, k2, k3 = jax.random.split(key, 3)
    bound1 = 1.0 / math.sqrt(input_layer)
    w1 = jax.random.uniform(k1, (HIDDEN, input_layer), jnp.float32, -bound1, bound1)
    b1 = jax.random.uniform(k2, (HIDDEN,), jnp.float32, -bound1, bound1)
    bound2 = 1.0 / math.sqrt(HIDDEN)
    w2 = jax.random.uniform(k3, (OUTPUT, HIDDEN), jnp.float32, -bound2, bound2)
    return w1, b1, w2


def pad_params(w1, b1, w2):
    # Explicit zero padding of the hidden dim (correctness-critical: the pad
    # must be zero so it contributes nothing through bias / activation / w2).
    pad = HIDDEN_PAD - HIDDEN
    w1_pad = jnp.pad(w1.T, ((0, 0), (0, pad)))                        # (D, H_PAD)
    b1_pad = jnp.pad(b1.reshape(1, HIDDEN), ((0, 0), (0, pad)))       # (1, H_PAD)
    w2_pad = jnp.pad(w2.reshape(OUTPUT, HIDDEN), ((0, 0), (0, pad)))  # (1, H_PAD)
    return w1_pad, b1_pad, w2_pad


if __name__ == "__main__":
    key = jax.random.PRNGKey(0)
    batch = 8
    input_layer = 32

    kx, kp, kx2 = jax.random.split(key, 3)
    x = jax.random.normal(kx, (batch, input_layer), jnp.float32)
    w1, b1, w2 = init_params(kp, input_layer)
    w1_pad, b1_pad, w2_pad = pad_params(w1, b1, w2)

    def reference(xx, act):
        h = jnp.dot(xx, w1.T, precision=jax.lax.Precision.HIGHEST) + b1
        if act == "ReLU":
            h = jnp.maximum(h, 0.0)
        elif act == "Tanh":
            h = jnp.tanh(h)
        else:
            h = jax.nn.sigmoid(h)
        return jnp.dot(h, w2.T, precision=jax.lax.Precision.HIGHEST)

    # Small-batch (no-grid) path, ReLU.
    out = jax.block_until_ready(mlp_forward(x, w1_pad, b1_pad, w2_pad))
    assert out.shape == (batch, OUTPUT)
    assert jnp.allclose(out, reference(x, "ReLU"), atol=1e-4, rtol=1e-4)

    # Small-batch path, Tanh (exercises the EUP activation branch).
    out_t = jax.block_until_ready(
        mlp_forward(x, w1_pad, b1_pad, w2_pad, activation="Tanh"))
    assert jnp.allclose(out_t, reference(x, "Tanh"), atol=1e-4, rtol=1e-4)

    # Batch-tiled ("parallel" grid) path, ReLU, including a ragged batch.
    x_big = jax.random.normal(kx2, (500, input_layer), jnp.float32)
    out_big = jax.block_until_ready(mlp_forward(x_big, w1_pad, b1_pad, w2_pad))
    assert out_big.shape == (500, OUTPUT)
    assert jnp.allclose(out_big, reference(x_big, "ReLU"), atol=1e-4, rtol=1e-4)

    print("KERNEL_OK")
</pallas_src>

<mosaic_0001>
module attributes {stable_mosaic.version = 11 : i64} {
  func.func @_mlp_kernel(%arg0: memref<8x32xf32, #tpu.memory_space<vmem>>, %arg1: memref<32x256xf32, #tpu.memory_space<vmem>>, %arg2: memref<1x256xf32, #tpu.memory_space<vmem>>, %arg3: memref<1x256xf32, #tpu.memory_space<vmem>>, %arg4: memref<8x128xf32, #tpu.memory_space<vmem>>) attributes {dimension_semantics = [], scalar_prefetch = 0 : i64, scratch_operands = 0 : i64, tpu.core_type = #tpu.core_type<tc>} {
    %c0 = arith.constant 0 : index
    %c0_0 = arith.constant 0 : index
    %0 = vector.load %arg0[%c0, %c0_0] : memref<8x32xf32, #tpu.memory_space<vmem>>, vector<8x32xf32>
    %c0_1 = arith.constant 0 : index
    %c0_2 = arith.constant 0 : index
    %1 = vector.load %arg1[%c0_1, %c0_2] : memref<32x256xf32, #tpu.memory_space<vmem>>, vector<32x256xf32>
    %cst = arith.constant dense<0.000000e+00> : vector<8x256xf32>
    %2 = tpu.matmul %0, %1, %cst {dimension_numbers = #tpu.dot_dimension_numbers<[1], [0], [0], [1], [0, 0, 1, 1], [], []>} : vector<8x32xf32>, vector<32x256xf32>, vector<8x256xf32> -> vector<8x256xf32>
    %c0_3 = arith.constant 0 : index
    %c0_4 = arith.constant 0 : index
    %3 = vector.load %arg2[%c0_3, %c0_4] : memref<1x256xf32, #tpu.memory_space<vmem>>, vector<1x256xf32>
    %4 = vector.broadcast %3 : vector<1x256xf32> to vector<8x256xf32>
    %5 = arith.addf %2, %4 : vector<8x256xf32>
    %cst_5 = arith.constant 0.000000e+00 : f32
    %6 = vector.broadcast %cst_5 : f32 to vector<8x256xf32>
    %7 = arith.maximumf %5, %6 : vector<8x256xf32>
    %c0_6 = arith.constant 0 : index
    %c0_7 = arith.constant 0 : index
    %8 = vector.load %arg3[%c0_6, %c0_7] : memref<1x256xf32, #tpu.memory_space<vmem>>, vector<1x256xf32>
    %9 = vector.broadcast %8 : vector<1x256xf32> to vector<8x256xf32>
    %10 = arith.mulf %7, %9 : vector<8x256xf32>
    %cst_8 = arith.constant dense<0.000000e+00> : vector<8xf32>
    %11 = vector.multi_reduction <add>, %10, %cst_8 [1] : vector<8x256xf32> to vector<8xf32>
    %12 = vector.shape_cast %11 : vector<8xf32> to vector<8x1xf32>
    %13 = vector.shape_cast %12 : vector<8x1xf32> to vector<8x1xf32>
    %14 = vector.broadcast %13 : vector<8x1xf32> to vector<8x128xf32>
    %c0_9 = arith.constant 0 : index
    %c0_10 = arith.constant 0 : index
    %15 = vector.load %arg4[%c0_9, %c0_10] : memref<8x128xf32, #tpu.memory_space<vmem>>, vector<8x128xf32>
    tpu.vector_store %arg4[%c0_9, %c0_10], %14 {strides = array<i32>} : memref<8x128xf32, #tpu.memory_space<vmem>>, vector<8x128xf32>,
    return
  }
}

</mosaic_0001>

<llo_original>
// kernel: tpu_custom_call.1
$region0: #{tpu_custom_call.1}
  #allocation0 [shape = 'u32[]', space=smem, size = 0x4, offset = 0x4, fixed_abs, tag = 'smem constant byte address 0x4 - core index']
  #allocation1 [shape = 'u32[144,128]{1,0:T(1,128)}', space=vmem, size = 0x12000, scoped, tag = 'internal scratch']
  %s0 = inlined_call_operand.hbm [shape: f32[8,32], index: 0, kind: input, shape index: {}]
  %s1 = inlined_call_operand.hbm [shape: f32[32,256], index: 1, kind: input, shape index: {}]
  %s2 = inlined_call_operand.vmem [shape: f32[1,256], index: 2, kind: input, shape index: {}]
  %s3 = inlined_call_operand.vmem [shape: f32[1,256], index: 3, kind: input, shape index: {}]
  %s4 = inlined_call_operand.hbm [shape: f32[8,128], index: 4, kind: output, shape index: {}]
  %s5 = sld [smem:[#allocation0]]
  $region34: #{tpu_custom_call.1} parent=0
    _
  %s7 = ssub.s32 1, %s5
  %s8 = scalar_select 0, %s7, %s5
  $region1: #{tpu_custom_call.1} parent=0
    #allocation2 [shape = 'u8[4096]{0}', space=vmem, size = 0x1000, scoped, tag = 'input window, operand 0, single buffered']
    #allocation3 [shape = 's32[1]{0}', space=sflag, size = 0x4, scoped, tag = 'scoped memory for tpu_custom_call.1']
    #allocation4 [shape = 's32[1]{0}', space=sflag, size = 0x4, scoped, tag = 'scoped memory for tpu_custom_call.1']
    #allocation5 [shape = 'u8[32768]{0}', space=vmem, size = 0x8000, scoped, tag = 'input window, operand 1, single buffered']
    #allocation6 [shape = 's32[1]{0}', space=sflag, size = 0x4, scoped, tag = 'scoped memory for tpu_custom_call.1']
    #allocation7 [shape = 'u8[4096]{0}', space=vmem, size = 0x1000, scoped, tag = 'output window, operand 0, single buffered']
    %9 = vsyncpa [#allocation3], 0
    %10 = vsyncpa [#allocation6], 0
    %11 = vsyncpa [#allocation4], 0
    // Predicated region
    $region2: #{tpu_custom_call.1} parent=1 // pred_check
      _
    $region3: #{tpu_custom_call.1} parent=1 // pred_check_branch
      %13 = sbr.rel (0) target = $region5
    $region4: #{tpu_custom_call.1} parent=1 // pred_region
      %s15 = ssub.s32 128, 128
      %16 = vsyncadd [#allocation3], %s15
      %s18 = sshll.u32 [#allocation2], 4
      %s19 = int_to_ptr.vmem [resolvable:$true] %s18
      %21 = dma.hbm_to_vmem [thread:$0]  %s0, 128, %s19, [#allocation3]
    $region5: #{tpu_custom_call.1} parent=1 // pred_fallthru
      _
    // Predicated region
    $region6: #{tpu_custom_call.1} parent=1 // pred_check
      _
    $region7: #{tpu_custom_call.1} parent=1 // pred_check_branch
      %23 = sbr.rel (0) target = $region9
    $region8: #{tpu_custom_call.1} parent=1 // pred_region
      %s25 = ssub.s32 1024, 1024
      %26 = vsyncadd [#allocation6], %s25
      %s27 = sshll.u32 [#allocation5], 4
      %s28 = int_to_ptr.vmem [resolvable:$true] %s27
      %33 = dma.hbm_to_vmem [thread:$0]  %s1, 1024, %s28, [#allocation6], 256, 256, 16
    $region9: #{tpu_custom_call.1} parent=1 // pred_fallthru
      _
    // Predicated region
    $region10: #{tpu_custom_call.1} parent=1 // pred_check
      _
    $region11: #{tpu_custom_call.1} parent=1 // pred_check_branch
      %35 = sbr.rel (0) target = $region13
    $region12: #{tpu_custom_call.1} parent=1 // pred_region
      _
    $region13: #{tpu_custom_call.1} parent=1 // pred_fallthru
      _
    // Predicated region
    $region14: #{tpu_custom_call.1} parent=1 // pred_check
      _
    $region15: #{tpu_custom_call.1} parent=1 // pred_check_branch
      %37 = sbr.rel (0) target = $region17
    $region16: #{tpu_custom_call.1} parent=1 // pred_region
      _
    $region17: #{tpu_custom_call.1} parent=1 // pred_fallthru
      _
    // Predicated region
    $region18: #{tpu_custom_call.1} parent=1 // pred_check
      _
    $region19: #{tpu_custom_call.1} parent=1 // pred_check_branch
      %39 = sbr.rel (0) target = $region21
    $region20: #{tpu_custom_call.1} parent=1 // pred_region
      %40 = dma.done [#allocation3], 128
    $region21: #{tpu_custom_call.1} parent=1 // pred_fallthru
      _
    // Predicated region
    $region22: #{tpu_custom_call.1} parent=1 // pred_check
      _
    $region23: #{tpu_custom_call.1} parent=1 // pred_check_branch
      %42 = sbr.rel (0) target = $region25
    $region24: #{tpu_custom_call.1} parent=1 // pred_region
      %43 = dma.done [#allocation6], 1024
    $region25: #{tpu_custom_call.1} parent=1 // pred_fallthru
      _
    %v44 = vld [vmem:[#allocation2] sm:$0xff]
    %v45 = vld [vmem:[#allocation5] sm:$0xff]
    %v46 = vld [vmem:[#allocation5 + $0x8] sm:$0xff]
    %v47 = vld [vmem:[#allocation5 + $0x10] sm:$0xff]
    %v48 = vld [vmem:[#allocation5 + $0x18] sm:$0xff]
    %v49 = vld [vmem:[#allocation5 + $0x20] sm:$0xff]
    %v50 = vld [vmem:[#allocation5 + $0x28] sm:$0xff]
    %v51 = vld [vmem:[#allocation5 + $0x30] sm:$0xff]
    %v52 = vld [vmem:[#allocation5 + $0x38] sm:$0xff]
    %v53 = vld [vmem:[%s2] sm:$0x3]
    %v55 = vlaneseq
    %v56 = vshrl.u32 %v55, 7
    %v57 = vsub.s32 0, %v56
    %v58 = vrot.slane %v53, %v57
    %v59 = vlaneseq
    %v60 = vshrl.u32 %v59, 7
    %v61 = vsub.s32 1, %v60
    %v62 = vrot.slane %v53, %v61
    %vm65 = vcmask 261120
    %v67 = vsel %vm65, %v44, 0
    %69 = vmatprep.subr.mxu0 0.0
    %70 = vmatpush1.msra.mxu0 0.0
    %71 = vmatprep.subr.mxu0 0.0
    %72 = vmatpush1.msra.mxu0 0.0
    %73 = vmatprep.subr.mxu0 0.0
    %74 = vmatpush1.msra.mxu0 0.0
    %75 = vmatprep.subr.mxu0 0.0
    %76 = vmatpush1.msra.mxu0 0.0
    %77 = vmatprep.subr.mxu0 0.0
    %78 = vmatpush1.msra.mxu0 0.0
    %79 = vmatprep.subr.mxu0 0.0
    %80 = vmatpush1.msra.mxu0 0.0
    %81 = vmatprep.subr.mxu0 0.0
    %82 = vmatpush1.msra.mxu0 0.0
    %83 = vmatprep.subr.mxu0 0.0
    %84 = vmatpush1.msra.mxu0 0.0
    %85 = vmatprep.subr.mxu0 0.0
    %86 = vmatpush1.msra.mxu0 0.0
    %87 = vmatprep.subr.mxu0 0.0
    %88 = vmatpush1.msra.mxu0 0.0
    %89 = vmatprep.subr.mxu0 0.0
    %90 = vmatpush1.msra.mxu0 0.0
    %91 = vmatprep.subr.mxu0 0.0
    %92 = vmatpush1.msra.mxu0 0.0
    %93 = vmatprep.subr.mxu0 %v52
    %94 = vmatpush1.msra.mxu0 %v51
    %95 = vmatprep.subr.mxu0 %v50
    %96 = vmatpush1.msra.mxu0 %v49
    %97 = vmatprep.subr.mxu0 %v48
    %98 = vmatpush1.msra.mxu0 %v47
    %99 = vmatprep.subr.mxu0 %v46
    %100 = vmatpush1.msra.mxu0 %v45
    %101 = vmatprep.subr.mxu0 0.0
    %102 = vmatpush2.msra.mxu0 0.0
    %103 = vmatprep.subr.mxu0 0.0
    %104 = vmatpush2.msra.mxu0 0.0
    %105 = vmatprep.subr.mxu0 0.0
    %106 = vmatpush2.msra.mxu0 0.0
    %107 = vmatprep.subr.mxu0 0.0
    %108 = vmatpush2.msra.mxu0 0.0
    %109 = vmatprep.subr.mxu0 0.0
    %110 = vmatpush2.msra.mxu0 0.0
    %111 = vmatprep.subr.mxu0 0.0
    %112 = vmatpush2.msra.mxu0 0.0
    %113 = vmatprep.subr.mxu0 0.0
    %114 = vmatpush2.msra.mxu0 0.0
    %115 = vmatprep.subr.mxu0 0.0
    %116 = vmatpush2.msra.mxu0 0.0
    %117 = vmatprep.subr.mxu0 0.0
    %118 = vmatpush2.msra.mxu0 0.0
    %119 = vmatprep.subr.mxu0 0.0
    %120 = vmatpush2.msra.mxu0 0.0
    %121 = vmatprep.subr.mxu0 0.0
    %122 = vmatpush2.msra.mxu0 0.0
    %123 = vmatprep.subr.mxu0 0.0
    %124 = vmatpush2.msra.mxu0 0.0
    %125 = vmatprep.subr.mxu0 0.0
    %126 = vmatpush2.msra.mxu0 0.0
    %127 = vmatprep.subr.mxu0 0.0
    %128 = vmatpush2.msra.mxu0 0.0
    %129 = vmatprep.subr.mxu0 0.0
    %130 = vmatpush2.msra.mxu0 0.0
    %131 = vmatprep.subr.mxu0 0.0
    %132 = vmatpush2.msra.mxu0 0.0
    %133 = vmatprep.mubr.f32.mxu0 0.0
    %134 = vmatmul.mubr.f32.gmra.mxu0 %v67
    %v135 = vpop.f32.mrf.mxu0
    %v136 = vadd.f32 %v58, %v135
    %v137 = vpop.f32.mrf.mxu0
    %v138 = vadd.f32 %v62, %v137
    %139 = vdwg.mxu0
    %v140 = vmax.f32 %v136, 0.0
    %v141 = vmax.f32 %v138, 0.0
    %v142 = vld [vmem:[%s3] sm:$0x3]
    %v144 = vlaneseq
    %v145 = vshrl.u32 %v144, 7
    %v146 = vsub.s32 0, %v145
    %v147 = vrot.slane %v142, %v146
    %v148 = vlaneseq
    %v149 = vshrl.u32 %v148, 7
    %v150 = vsub.s32 1, %v149
    %v151 = vrot.slane %v142, %v150
    %v154 = vmul.f32 %v140, %v147
    %v155 = vmul.f32 %v141, %v151
    %v156 = vadd.f32 %v154, %v155
    %157 = vadd.xlane.f32.xlu0 %v156
    %v158 = vpop.xlane.xlu0 %157
    %159 = vst [vmem:[#allocation7] sm:$0xff] %v158
    // Predicated region
    $region26: #{tpu_custom_call.1} parent=1 // pred_check
      _
    $region27: #{tpu_custom_call.1} parent=1 // pred_check_branch
      %161 = sbr.rel (0) target = $region29
    $region28: #{tpu_custom_call.1} parent=1 // pred_region
      %s163 = ssub.s32 128, 128
      %164 = vsyncadd [#allocation4], %s163
      %s166 = sshll.u32 [#allocation7], 4
      %s167 = int_to_ptr.vmem [resolvable:$true] %s166
      %169 = dma.vmem_to_hbm [thread:$0]  %s167, 128, %s4, [#allocation4]
    $region29: #{tpu_custom_call.1} parent=1 // pred_fallthru
      _
    // Predicated region
    $region30: #{tpu_custom_call.1} parent=1 // pred_check
      _
    $region31: #{tpu_custom_call.1} parent=1 // pred_check_branch
      %171 = sbr.rel (0) target = $region33
    $region32: #{tpu_custom_call.1} parent=1 // pred_region
      %172 = dma.done [#allocation4], 128
    $region33: #{tpu_custom_call.1} parent=1 // pred_fallthru
      _
    %173 = vsyncpa [#allocation3], 1
    %174 = vsyncpa [#allocation6], 1
    %175 = vsyncpa [#allocation4], 1

</llo_original>
